<compile_context>
chip_gen: v7x
topology: tpu7x:2x2x1
jax: 0.10.0
libtpu: 0.0.40
codegen_flags: <defaults>
</compile_context>

<pallas_src>
import jax
import jax.numpy as jnp
from jax.experimental import pallas as pl
from jax.experimental.pallas import tpu as pltpu


# ----------------------------------------------------------------------------
# Path 1: zero-copy identity via input/output aliasing (no HBM round trip).
# ----------------------------------------------------------------------------
def _alias_kernel(x_ref, o_ref):
    # Output buffer *is* the input buffer; nothing to move.  touch() pins a
    # read+write dependency so the aliased output counts as produced here.
    pltpu.touch(o_ref)


def _identity_alias(x: jax.Array) -> jax.Array:
    return pl.pallas_call(
        _alias_kernel,
        out_shape=jax.ShapeDtypeStruct(x.shape, x.dtype),
        in_specs=[pl.BlockSpec(memory_space=pl.ANY)],   # raw ref, no auto-DMA
        out_specs=pl.BlockSpec(memory_space=pl.ANY),
        input_output_aliases={0: 0},                    # output == input buffer
    )(x)


# ----------------------------------------------------------------------------
# Path 2: bandwidth-optimized tiled copy (fallback).
# ----------------------------------------------------------------------------
def _copy_kernel(x_ref, o_ref):
    o_ref[...] = x_ref[...]


def _identity_copy(x: jax.Array) -> jax.Array:
    orig_shape = x.shape
    flat = x.reshape(-1)
    total = int(flat.shape[0])

    # Lane-dense 2-D view: largest C in {4096..128} dividing total so every
    # store is an unmasked full-lane vst instead of a masked partial store.
    C = None
    for cand in (4096, 2048, 1024, 512, 256, 128):
        if total % cand == 0:
            C = cand
            break
    if C is None:            # tiny / odd sizes: single row, full extent
        C = total
    M = total // C
    x2 = flat.reshape(M, C)

    # Tile selection: (8,128)-aligned (or full extent), <= ~2 MiB per tile so
    # double-buffered in+out (~4x tile) stays <= 8 MiB on every generation.
    bytes_per_el = jnp.dtype(x.dtype).itemsize
    max_tile_bytes = 2 * 1024 * 1024

    tn = min(C, 2048)
    if tn != C:
        tn = max(128, (tn // 128) * 128)

    tm_cap = max(8, max_tile_bytes // max(1, tn * bytes_per_el))
    tm = min(M, tm_cap)
    if tm != M:
        tm = max(8, (tm // 8) * 8)

    grid = (pl.cdiv(M, tm), pl.cdiv(C, tn))

    out2 = pl.pallas_call(
        _copy_kernel,
        out_shape=jax.ShapeDtypeStruct((M, C), x.dtype),
        grid=grid,
        in_specs=[pl.BlockSpec((tm, tn), lambda i, j: (i, j))],
        out_specs=pl.BlockSpec((tm, tn), lambda i, j: (i, j)),
        compiler_params=pltpu.CompilerParams(
            # Both axes independent: lets v7x shard the grid over its 2 TCs.
            dimension_semantics=("parallel", "parallel"),
        ),
    )(x2)

    return out2.reshape(orig_shape)


# ----------------------------------------------------------------------------
# Public wrapper: TestModel.forward(x) == x
# ----------------------------------------------------------------------------
def identity_pallas(x: jax.Array) -> jax.Array:
    """Identity forward of TestModel.

    Prefers the zero-copy aliased kernel (no HBM traffic); falls back to a
    lane-dense tiled copy kernel if aliasing cannot be compiled/run here.
    """
    try:
        y = _identity_alias(x)
        jax.block_until_ready(y)   # surface any deferred lowering/run errors
        return y
    except Exception:
        return _identity_copy(x)


if __name__ == "__main__":
    key = jax.random.PRNGKey(0)
    # Small NCHW-like input consistent with a generic module forward.
    x = jax.random.normal(key, (2, 4, 16, 16), dtype=jnp.float32)

    y = identity_pallas(x)
    jax.block_until_ready(y)

    assert y.shape == x.shape and y.dtype == x.dtype
    assert bool(jnp.all(y == x))
    print("KERNEL_OK")
</pallas_src>

<mosaic_0001>
module attributes {stable_mosaic.version = 11 : i64} {
  func.func @_alias_kernel(%arg0: memref<2x4x16x16xf32, #tpu.memory_space<any>>, %arg1: memref<2x4x16x16xf32, #tpu.memory_space<any>>) attributes {dimension_semantics = [], scalar_prefetch = 0 : i64, scratch_operands = 0 : i64, tpu.core_type = #tpu.core_type<tc>} {
    return
  }
}

module attributes {stable_mosaic.version = 11 : i64} {
  func.func @_copy_kernel(%arg0: i32, %arg1: i32, %arg2: memref<1x2048xf32, #tpu.memory_space<vmem>>, %arg3: memref<1x2048xf32, #tpu.memory_space<vmem>>) attributes {dimension_semantics = [#tpu.dimension_semantics<parallel>, #tpu.dimension_semantics<parallel>], iteration_bounds = array<i64: 1, 1>, scalar_prefetch = 0 : i64, scratch_operands = 0 : i64, tpu.core_type = #tpu.core_type<tc>, window_params = [{transform_indices = @transform_0, window_bounds = array<i64: 1, 2048>}, {transform_indices = @transform_1, window_bounds = array<i64: 1, 2048>}]} {
    %c0 = arith.constant 0 : index
    %c0_0 = arith.constant 0 : index
    %0 = vector.load %arg2[%c0, %c0_0] : memref<1x2048xf32, #tpu.memory_space<vmem>>, vector<1x2048xf32>
    %c0_1 = arith.constant 0 : index
    %c0_2 = arith.constant 0 : index
    %1 = vector.load %arg3[%c0_1, %c0_2] : memref<1x2048xf32, #tpu.memory_space<vmem>>, vector<1x2048xf32>
    tpu.vector_store %arg3[%c0_1, %c0_2], %0 {strides = array<i32>} : memref<1x2048xf32, #tpu.memory_space<vmem>>, vector<1x2048xf32>,
    return
  }
  func.func @transform_0(%arg0: i32, %arg1: i32) -> (i32, i32) {
    %c0_i32 = arith.constant 0 : i32
    return %arg0, %arg1 : i32, i32
  }
  func.func @transform_1(%arg0: i32, %arg1: i32) -> (i32, i32) {
    %c0_i32 = arith.constant 0 : i32
    return %arg0, %arg1 : i32, i32
  }
}

</mosaic_0001>

<llo_original>
// kernel: tpu_custom_call.1
$region0: #{tpu_custom_call.1}
  #allocation0 [shape = 'u32[]', space=smem, size = 0x4, offset = 0x4, fixed_abs, tag = 'smem constant byte address 0x4 - core index']
  #allocation1 [shape = 'u32[144,128]{1,0:T(1,128)}', space=vmem, size = 0x12000, scoped, tag = 'internal scratch']
  %s0 = inlined_call_operand.hbm [shape: f32[2,4,16,16], index: 0, kind: input, shape index: {}, may-alias: {0,1}]
  %s1 = inlined_call_operand.hbm [shape: f32[2,4,16,16], index: 1, kind: output, shape index: {}, may-alias: {0,1}]
  %s2 = sld [smem:[#allocation0]]
  $region2: #{tpu_custom_call.1} parent=0
    _
  %s4 = ssub.s32 1, %s2
  %s5 = scalar_select 0, %s4, %s2

// kernel: tpu_custom_call.1
$region0: #{tpu_custom_call.1}
  #allocation0 [shape = 'u32[]', space=smem, size = 0x4, offset = 0x4, fixed_abs, tag = 'smem constant byte address 0x4 - core index']
  #allocation1 [shape = 'u32[144,128]{1,0:T(1,128)}', space=vmem, size = 0x12000, scoped, tag = 'internal scratch']
  %s0 = inlined_call_operand.hbm [shape: f32[1,2048], index: 0, kind: input, shape index: {}]
  %s1 = inlined_call_operand.hbm [shape: f32[1,2048], index: 1, kind: output, shape index: {}]
  %s2 = sld [smem:[#allocation0]]
  $region18: #{tpu_custom_call.1} parent=0
    _
  %s4 = ssub.s32 1, %s2
  %s5 = scalar_select 0, %s4, %s2
  $region1: #{tpu_custom_call.1} parent=0
    #allocation2 [shape = 'u8[8192]{0}', space=vmem, size = 0x2000, scoped, tag = 'input window, operand 0, single buffered']
    #allocation3 [shape = 's32[1]{0}', space=sflag, size = 0x4, scoped, tag = 'scoped memory for tpu_custom_call.1']
    #allocation4 [shape = 's32[1]{0}', space=sflag, size = 0x4, scoped, tag = 'scoped memory for tpu_custom_call.1']
    #allocation5 [shape = 'u8[8192]{0}', space=vmem, size = 0x2000, scoped, tag = 'output window, operand 0, single buffered']
    %6 = vsyncpa [#allocation3], 0
    %7 = vsyncpa [#allocation4], 0
    // Predicated region
    $region2: #{tpu_custom_call.1} parent=1 // pred_check
      _
    $region3: #{tpu_custom_call.1} parent=1 // pred_check_branch
      %9 = sbr.rel (0) target = $region5
    $region4: #{tpu_custom_call.1} parent=1 // pred_region
      %s11 = ssub.s32 256, 256
      %12 = vsyncadd [#allocation3], %s11
      %s14 = sshll.u32 [#allocation2], 4
      %s15 = int_to_ptr.vmem [resolvable:$true] %s14
      %17 = dma.hbm_to_vmem [thread:$0]  %s0, 256, %s15, [#allocation3]
    $region5: #{tpu_custom_call.1} parent=1 // pred_fallthru
      _
    // Predicated region
    $region6: #{tpu_custom_call.1} parent=1 // pred_check
      _
    $region7: #{tpu_custom_call.1} parent=1 // pred_check_branch
      %19 = sbr.rel (0) target = $region9
    $region8: #{tpu_custom_call.1} parent=1 // pred_region
      %20 = dma.done [#allocation3], 256
    $region9: #{tpu_custom_call.1} parent=1 // pred_fallthru
      _
    %v21 = vld [vmem:[#allocation2] sm:$0xff]
    %v22 = vld [vmem:[#allocation2 + $0x8] sm:$0xff]
    %23 = vst [vmem:[#allocation5] sm:$0xff] %v21
    %24 = vst [vmem:[#allocation5 + $0x8] sm:$0xff] %v22
    // Predicated region
    $region10: #{tpu_custom_call.1} parent=1 // pred_check
      _
    $region11: #{tpu_custom_call.1} parent=1 // pred_check_branch
      %26 = sbr.rel (0) target = $region13
    $region12: #{tpu_custom_call.1} parent=1 // pred_region
      %s28 = ssub.s32 256, 256
      %29 = vsyncadd [#allocation4], %s28
      %s31 = sshll.u32 [#allocation5], 4
      %s32 = int_to_ptr.vmem [resolvable:$true] %s31
      %34 = dma.vmem_to_hbm [thread:$0]  %s32, 256, %s1, [#allocation4]
    $region13: #{tpu_custom_call.1} parent=1 // pred_fallthru
      _
    // Predicated region
    $region14: #{tpu_custom_call.1} parent=1 // pred_check
      _
    $region15: #{tpu_custom_call.1} parent=1 // pred_check_branch
      %36 = sbr.rel (0) target = $region17
    $region16: #{tpu_custom_call.1} parent=1 // pred_region
      %37 = dma.done [#allocation4], 256
    $region17: #{tpu_custom_call.1} parent=1 // pred_fallthru
      _
    %38 = vsyncpa [#allocation3], 1
    %39 = vsyncpa [#allocation4], 1

</llo_original>
